<compile_context>
chip_gen: v7x
topology: tpu7x:2x2x1
jax: 0.10.0
libtpu: 0.0.40
codegen_flags: <defaults>
</compile_context>

<pallas_src>
import jax
import jax.numpy as jnp
from jax import lax
from jax.experimental import pallas as pl
from jax.experimental.pallas import tpu as pltpu

_LANE = 128                           # vreg lane width
_SUBLANE = 8                          # f32 sublane tiling
_MAX_TILE_BYTES = 4 * 1024 * 1024     # per-input per-block VMEM footprint
_VMEM_LIMIT_BYTES = 40 * 1024 * 1024  # 2 inputs x 2 buffers x 4 MiB + headroom


def _split_bulk_tail(x):
    """Flatten x; return (bulk (rows,128) slab, tail <128 elems or None, rows).

    The slab is a free bitcast when x.size % 128 == 0 (no HBM copy)."""
    flat = x.reshape(-1)
    n = flat.shape[0]
    rows = n // _LANE
    n_bulk = rows * _LANE
    if rows == 0:
        return None, flat, 0
    if n_bulk == n:
        return flat.reshape(rows, _LANE), None, rows
    # TODO(synk): the prefix slice copies the bulk once for non-128-multiple
    # sizes; a 1-D-block kernel with full in-kernel masking would avoid it.
    return flat[:n_bulk].reshape(rows, _LANE), flat[n_bulk:], rows


def _tail_hinge_sum(tail, sign):
    if tail is None or tail.shape[0] == 0:
        return 0.0
    return jnp.sum(jnp.maximum(1.0 + sign * tail.astype(jnp.float32), 0.0))


def hinge_loss(logit_real, logit_gene):
    """Pallas TPU implementation of HingeLoss.forward."""
    n_real = logit_real.size
    n_gene = logit_gene.size

    real_bulk, real_tail, rows_r = _split_bulk_tail(logit_real)
    gene_bulk, gene_tail, rows_g = _split_bulk_tail(logit_gene)

    if rows_r == 0 or rows_g == 0:
        # Degenerate tiny inputs (< 128 elements): plain jnp is cheapest.
        loss_real = jnp.mean(jnp.maximum(1.0 - logit_real.astype(jnp.float32), 0.0))
        loss_gene = jnp.mean(jnp.maximum(1.0 + logit_gene.astype(jnp.float32), 0.0))
        return 0.5 * (loss_real + loss_gene)

    itemsize = max(real_bulk.dtype.itemsize, gene_bulk.dtype.itemsize)
    cap_rows = max(_SUBLANE,
                   (_MAX_TILE_BYTES // (_LANE * itemsize)) // _SUBLANE * _SUBLANE)
    rows_max = max(rows_r, rows_g)

    if rows_max <= cap_rows:
        # ---- small/medium fast path: one full-array block per input ----
        num_tiles = 1
        tile_rows = rows_max                 # unused (masking disabled)
        spec_r = pl.BlockSpec((rows_r, _LANE), lambda i: (0, 0))
        spec_g = pl.BlockSpec((rows_g, _LANE), lambda i: (0, 0))
        mask_r = mask_g = False
    else:
        # ---- large-input tiled path: ragged last block masked in-kernel ----
        tile_rows = cap_rows
        num_tiles = pl.cdiv(rows_max, tile_rows)
        nblk_r = pl.cdiv(rows_r, tile_rows)
        nblk_g = pl.cdiv(rows_g, tile_rows)

        def _imap(n_blocks):
            if n_blocks == num_tiles:
                return lambda i: (i, 0)
            last = n_blocks - 1
            # Smaller input: clamp so no DMA targets a fully out-of-bounds
            # block; the in-kernel mask (computed from the *unclamped*
            # program id) zeroes the duplicated reads.
            return lambda i: (jnp.minimum(i, last), 0)

        spec_r = pl.BlockSpec((tile_rows, _LANE), _imap(nblk_r))
        spec_g = pl.BlockSpec((tile_rows, _LANE), _imap(nblk_g))
        mask_r = (num_tiles * tile_rows != rows_r)
        mask_g = (num_tiles * tile_rows != rows_g)

    def kernel(real_ref, gene_ref, out_ref):
        # Native-dtype DMA; cast to f32 in-kernel (required for bf16 on v5e).
        r = real_ref[...].astype(jnp.float32)
        g = gene_ref[...].astype(jnp.float32)
        hr = jnp.maximum(1.0 - r, 0.0)
        hg = jnp.maximum(1.0 + g, 0.0)
        if mask_r or mask_g:   # trace-time flags; common aligned case skips this
            row = (pl.program_id(0) * tile_rows
                   + lax.broadcasted_iota(jnp.int32, (tile_rows, _LANE), 0))
            if mask_r:
                hr = jnp.where(row < rows_r, hr, 0.0)
            if mask_g:
                hg = jnp.where(row < rows_g, hg, 0.0)
        # Raw (unscaled) per-lane partial sums; 0.5/n scaling is deferred to
        # the tiny partials outside the kernel (saves 2 VALU muls per element
        # pair, keeps the hot loop vld + VALU only).
        # TODO(synk): strip-mine the sublane reduce with lax.fori_loop if the
        # bundle dump ever shows hr/hg materialized to VMEM before the sum.
        out_ref[0, 0:1, :] = jnp.sum(hr, axis=0, keepdims=True)
        out_ref[0, 1:2, :] = jnp.sum(hg, axis=0, keepdims=True)

    cost = pl.CostEstimate(
        flops=4 * (rows_r + rows_g) * _LANE,
        transcendentals=0,
        bytes_accessed=(rows_r * _LANE * logit_real.dtype.itemsize
                        + rows_g * _LANE * logit_gene.dtype.itemsize
                        + num_tiles * 2 * _LANE * 4),
    )

    partials = pl.pallas_call(
        kernel,
        out_shape=jax.ShapeDtypeStruct((num_tiles, 2, _LANE), jnp.float32),
        grid=(num_tiles,),
        in_specs=[spec_r, spec_g],
        out_specs=pl.BlockSpec((1, 2, _LANE), lambda i: (i, 0, 0)),
        compiler_params=pltpu.CompilerParams(
            # TODO(synk): on v7x, gate this to pltpu.CORE_PARALLEL for large
            # inputs so both TensorCores split the row-tile loop.
            dimension_semantics=("parallel",),
            vmem_limit_bytes=_VMEM_LIMIT_BYTES,
        ),
        cost_estimate=cost,
    )(real_bulk, gene_bulk)

    sum_real = jnp.sum(partials[:, 0, :]) + _tail_hinge_sum(real_tail, -1.0)
    sum_gene = jnp.sum(partials[:, 1, :]) + _tail_hinge_sum(gene_tail, 1.0)
    return 0.5 * (sum_real / n_real + sum_gene / n_gene)


def _reference(logit_real, logit_gene):
    loss_real = jnp.mean(jnp.maximum(1.0 - logit_real, 0.0))
    loss_gene = jnp.mean(jnp.maximum(1.0 + logit_gene, 0.0))
    return 0.5 * (loss_real + loss_gene)


if __name__ == "__main__":
    key = jax.random.PRNGKey(0)
    k1, k2 = jax.random.split(key)
    # Discriminator-style logits, NCHW.
    logit_real = jax.random.normal(k1, (2, 4, 16, 16), dtype=jnp.float32)
    logit_gene = jax.random.normal(k2, (2, 4, 16, 16), dtype=jnp.float32)

    out = jax.jit(hinge_loss)(logit_real, logit_gene)
    out = jax.block_until_ready(out)

    ref = _reference(logit_real, logit_gene)
    assert jnp.allclose(out, ref, rtol=1e-5, atol=1e-6), (out, ref)
    print("KERNEL_OK")
</pallas_src>

<mosaic_0001>
module attributes {stable_mosaic.version = 11 : i64} {
  func.func @kernel(%arg0: i32, %arg1: memref<16x128xf32, #tpu.memory_space<vmem>>, %arg2: memref<16x128xf32, #tpu.memory_space<vmem>>, %arg3: memref<1x2x128xf32, #tpu.memory_space<vmem>>) attributes {dimension_semantics = [#tpu.dimension_semantics<parallel>], iteration_bounds = array<i64: 1>, scalar_prefetch = 0 : i64, scratch_operands = 0 : i64, tpu.core_type = #tpu.core_type<tc>, window_params = [{pipeline_mode = #tpu.pipeline_mode<synchronous>, transform_indices = @transform_0, window_bounds = array<i64: 16, 128>}, {pipeline_mode = #tpu.pipeline_mode<synchronous>, transform_indices = @transform_1, window_bounds = array<i64: 16, 128>}, {transform_indices = @transform_2, window_bounds = array<i64: 1, 2, 128>}]} {
    %c0 = arith.constant 0 : index
    %c0_0 = arith.constant 0 : index
    %0 = vector.load %arg1[%c0, %c0_0] : memref<16x128xf32, #tpu.memory_space<vmem>>, vector<16x128xf32>
    %c0_1 = arith.constant 0 : index
    %c0_2 = arith.constant 0 : index
    %1 = vector.load %arg2[%c0_1, %c0_2] : memref<16x128xf32, #tpu.memory_space<vmem>>, vector<16x128xf32>
    %cst = arith.constant 1.000000e+00 : f32
    %2 = vector.broadcast %cst : f32 to vector<16x128xf32>
    %3 = arith.subf %2, %0 : vector<16x128xf32>
    %cst_3 = arith.constant 0.000000e+00 : f32
    %4 = vector.broadcast %cst_3 : f32 to vector<16x128xf32>
    %5 = arith.maximumf %3, %4 : vector<16x128xf32>
    %cst_4 = arith.constant 1.000000e+00 : f32
    %6 = vector.broadcast %cst_4 : f32 to vector<16x128xf32>
    %7 = arith.addf %6, %1 : vector<16x128xf32>
    %cst_5 = arith.constant 0.000000e+00 : f32
    %8 = vector.broadcast %cst_5 : f32 to vector<16x128xf32>
    %9 = arith.maximumf %7, %8 : vector<16x128xf32>
    %cst_6 = arith.constant dense<0.000000e+00> : vector<128xf32>
    %10 = vector.multi_reduction <add>, %5, %cst_6 [0] : vector<16x128xf32> to vector<128xf32>
    %11 = vector.shape_cast %10 : vector<128xf32> to vector<1x128xf32>
    %c0_7 = arith.constant 0 : index
    %c0_8 = arith.constant 0 : index
    %c0_9 = arith.constant 0 : index
    %12 = vector.load %arg3[%c0_7, %c0_8, %c0_9] : memref<1x2x128xf32, #tpu.memory_space<vmem>>, vector<1x1x128xf32>
    %13 = vector.shape_cast %12 : vector<1x1x128xf32> to vector<1x128xf32>
    %14 = vector.shape_cast %11 : vector<1x128xf32> to vector<1x1x128xf32>
    tpu.vector_store %arg3[%c0_7, %c0_8, %c0_9], %14 {strides = array<i32>} : memref<1x2x128xf32, #tpu.memory_space<vmem>>, vector<1x1x128xf32>,
    %cst_10 = arith.constant dense<0.000000e+00> : vector<128xf32>
    %15 = vector.multi_reduction <add>, %9, %cst_10 [0] : vector<16x128xf32> to vector<128xf32>
    %16 = vector.shape_cast %15 : vector<128xf32> to vector<1x128xf32>
    %c0_11 = arith.constant 0 : index
    %c1 = arith.constant 1 : index
    %c0_12 = arith.constant 0 : index
    %17 = vector.load %arg3[%c0_11, %c1, %c0_12] : memref<1x2x128xf32, #tpu.memory_space<vmem>>, vector<1x1x128xf32>
    %18 = vector.shape_cast %17 : vector<1x1x128xf32> to vector<1x128xf32>
    %19 = vector.shape_cast %16 : vector<1x128xf32> to vector<1x1x128xf32>
    tpu.vector_store %arg3[%c0_11, %c1, %c0_12], %19 {strides = array<i32>} : memref<1x2x128xf32, #tpu.memory_space<vmem>>, vector<1x1x128xf32>,
    return
  }
  func.func @transform_0(%arg0: i32) -> (i32, i32) {
    %c0_i32 = arith.constant 0 : i32
    %c0_i32_0 = arith.constant 0 : i32
    %c0_i32_1 = arith.constant 0 : i32
    return %c0_i32, %c0_i32_0 : i32, i32
  }
  func.func @transform_1(%arg0: i32) -> (i32, i32) {
    %c0_i32 = arith.constant 0 : i32
    %c0_i32_0 = arith.constant 0 : i32
    %c0_i32_1 = arith.constant 0 : i32
    return %c0_i32, %c0_i32_0 : i32, i32
  }
  func.func @transform_2(%arg0: i32) -> (i32, i32, i32) {
    %c0_i32 = arith.constant 0 : i32
    %c0_i32_0 = arith.constant 0 : i32
    %c0_i32_1 = arith.constant 0 : i32
    return %arg0, %c0_i32, %c0_i32_0 : i32, i32, i32
  }
}

</mosaic_0001>

<llo_original>
// kernel: hinge_loss.1
$region0: #{hinge_loss.1}
  #allocation0 [shape = 'u32[]', space=smem, size = 0x4, offset = 0x4, fixed_abs, tag = 'smem constant byte address 0x4 - core index']
  #allocation1 [shape = 'u32[144,128]{1,0:T(1,128)}', space=vmem, size = 0x12000, scoped, tag = 'internal scratch']
  %s0 = inlined_call_operand.vmem [shape: f32[16,128], index: 0, kind: input, shape index: {}]
  %s1 = inlined_call_operand.vmem [shape: f32[16,128], index: 1, kind: input, shape index: {}]
  %s2 = inlined_call_operand.vmem [shape: f32[1,2,128], index: 2, kind: output, shape index: {}]
  %s3 = sld [smem:[#allocation0]]
  $region18: #{hinge_loss.1} parent=0
    _
  %s5 = ssub.s32 1, %s3
  %s6 = scalar_select 0, %s5, %s3
  // Predicated region
  $region2: #{hinge_loss.1} parent=0 // pred_check
    _
  $region3: #{hinge_loss.1} parent=0 // pred_check_branch
    %8 = sbr.rel (0) target = $region5
  $region4: #{hinge_loss.1} parent=0 // pred_region
    _
  $region5: #{hinge_loss.1} parent=0 // pred_fallthru
    _
  // Predicated region
  $region6: #{hinge_loss.1} parent=0 // pred_check
    _
  $region7: #{hinge_loss.1} parent=0 // pred_check_branch
    %10 = sbr.rel (0) target = $region9
  $region8: #{hinge_loss.1} parent=0 // pred_region
    _
  $region9: #{hinge_loss.1} parent=0 // pred_fallthru
    _
  %v11 = vld [vmem:[%s0] sm:$0xff]
  %v12 = vld [vmem:[%s0 + $0x8] sm:$0xff]
  %v13 = vld [vmem:[%s1] sm:$0xff]
  %v14 = vld [vmem:[%s1 + $0x8] sm:$0xff]
  %v15 = vsub.f32 1.0, %v11
  %v16 = vsub.f32 1.0, %v12
  %v17 = vmax.f32 %v15, 0.0
  %v18 = vmax.f32 %v16, 0.0
  %v19 = vadd.f32 %v13, 1.0
  %v20 = vadd.f32 %v14, 1.0
  %v21 = vmax.f32 %v19, 0.0
  %v22 = vmax.f32 %v20, 0.0
  %v23 = vadd.f32 %v17, %v18
  %v24 = vrot.slane %v23, 4
  %v25 = vadd.f32 %v23, %v24
  %v26 = vrot.slane %v25, 2
  %v27 = vadd.f32 %v25, %v26
  %v28 = vrot.slane %v27, 1
  %v29 = vadd.f32 %v27, %v28
  %30 = vst [vmem:[%s2] sm:$0x1] %v29
  %v31 = vadd.f32 %v21, %v22
  %v32 = vrot.slane %v31, 4
  %v33 = vadd.f32 %v31, %v32
  %v34 = vrot.slane %v33, 2
  %v35 = vadd.f32 %v33, %v34
  %v36 = vrot.slane %v35, 1
  %v37 = vadd.f32 %v35, %v36
  %38 = vst [vmem:[%s2 + $0x1] sm:$0x1] %v37
  // Predicated region
  $region10: #{hinge_loss.1} parent=0 // pred_check
    _
  $region11: #{hinge_loss.1} parent=0 // pred_check_branch
    %40 = sbr.rel (0) target = $region13
  $region12: #{hinge_loss.1} parent=0 // pred_region
    _
  $region13: #{hinge_loss.1} parent=0 // pred_fallthru
    _
  // Predicated region
  $region14: #{hinge_loss.1} parent=0 // pred_check
    _
  $region15: #{hinge_loss.1} parent=0 // pred_check_branch
    %42 = sbr.rel (0) target = $region17
  $region16: #{hinge_loss.1} parent=0 // pred_region
    _
  $region17: #{hinge_loss.1} parent=0 // pred_fallthru
    _

</llo_original>
